<compile_context>
chip_gen: v6e
topology: v6e:2x2x1
jax: 0.10.0
libtpu: 0.0.40
codegen_flags: <defaults>
</compile_context>

<pallas_src>
import functools
import math

import jax
import jax.numpy as jnp
from jax.experimental import pallas as pl
from jax.experimental.pallas import tpu as pltpu


# VMEM budget for the double-buffered (input + output) row-tile pipelines.
# Kept well under the smallest physical VMEM (v7x: 64 MiB total) so the same
# sizing works on v5e / v6e / v7x; f32 compute temporaries use the remaining
# headroom granted by _VMEM_LIMIT_BYTES.
_TILE_PIPELINE_BUDGET_BYTES = 20 * 1024 * 1024
_VMEM_LIMIT_BYTES = 48 * 1024 * 1024
_MAX_TILE_ROWS = 1024  # mem-bound win saturates around here


def _round_up(x, m):
    return ((x + m - 1) // m) * m


def _sublane_multiple(dtype):
    # Sub-32-bit dtypes pack along sublanes: f32 -> 8 rows/vreg, bf16 -> 16,
    # int8/fp8 -> 32.  Tile rows must be a multiple of this.
    itemsize = jnp.dtype(dtype).itemsize
    return max(8, 32 // max(itemsize, 1))


def _choose_tile_rows(rows, hidden, dtype):
    """Largest sublane-aligned row tile whose double-buffered in+out tiles fit."""
    sub = _sublane_multiple(dtype)
    itemsize = jnp.dtype(dtype).itemsize
    # 2 buffers for the input pipeline + 2 buffers for the output pipeline.
    bytes_per_row = 4 * hidden * itemsize
    fit = _TILE_PIPELINE_BUDGET_BYTES // max(bytes_per_row, 1)
    tile = min(_MAX_TILE_ROWS, fit, _round_up(rows, sub))
    tile = max(sub, (tile // sub) * sub)
    return tile


def _lora_layernorm_kernel(x_ref, w_ref, b_ref, o_ref, *, eps):
    # x_ref: (tile_rows, H); w_ref/b_ref: (1, H) — already fused base+lora.
    x = x_ref[...].astype(jnp.float32)

    mean = jnp.mean(x, axis=-1, keepdims=True)
    xc = x - mean
    var = jnp.mean(xc * xc, axis=-1, keepdims=True)
    inv = jax.lax.rsqrt(var + eps)

    w = w_ref[...].astype(jnp.float32)   # (1, H), broadcast over rows
    b = b_ref[...].astype(jnp.float32)

    o_ref[...] = (xc * inv * w + b).astype(o_ref.dtype)


def lora_layer_norm(x, weight, bias, lora_weight, lora_bias, *, eps=1e-5,
                    tile_rows=None):
    """LayerNorm over the last dim with (weight+lora_weight), (bias+lora_bias)."""
    orig_shape = x.shape
    hidden = orig_shape[-1]
    rows = math.prod(orig_shape[:-1]) if len(orig_shape) > 1 else 1

    x2d = x.reshape(rows, hidden)

    # Fuse the LoRA parameter add once, outside the streaming kernel.
    # (These are tiny (hidden,) arrays; doing this per grid step wastes
    #  two param pipelines and a few VPU ops every iteration.)
    w2d = (weight + lora_weight).reshape(1, hidden)
    b2d = (bias + lora_bias).reshape(1, hidden)

    if tile_rows is None:
        tile_rows = _choose_tile_rows(rows, hidden, x.dtype)

    # Pad rows up to a tile multiple so arbitrary batch*seq products work;
    # padded rows are normalized independently (no cross-row contamination)
    # and sliced off afterwards.
    padded_rows = _round_up(rows, tile_rows)
    if padded_rows != rows:
        x2d = jnp.pad(x2d, ((0, padded_rows - rows), (0, 0)))

    grid = (padded_rows // tile_rows,)

    # NOTE: for production shapes hidden should be a multiple of 128 so vregs
    # and stores are lane-dense; hidden == full array dim is always legal.
    row_spec = pl.BlockSpec((tile_rows, hidden), lambda i: (i, 0))
    param_spec = pl.BlockSpec((1, hidden), lambda i: (0, 0))

    out2d = pl.pallas_call(
        functools.partial(_lora_layernorm_kernel, eps=eps),
        out_shape=jax.ShapeDtypeStruct((padded_rows, hidden), x.dtype),
        grid_spec=pltpu.PrefetchScalarGridSpec(
            num_scalar_prefetch=0,
            grid=grid,
            in_specs=[row_spec, param_spec, param_spec],
            out_specs=row_spec,
        ),
        compiler_params=pltpu.CompilerParams(
            dimension_semantics=("parallel",),
            vmem_limit_bytes=_VMEM_LIMIT_BYTES,
        ),
    )(x2d, w2d, b2d)

    if padded_rows != rows:
        out2d = out2d[:rows]
    return out2d.reshape(orig_shape)


def _reference_layer_norm(x, weight, bias, lora_weight, lora_bias, eps=1e-5):
    w = weight + lora_weight
    b = bias + lora_bias
    mean = jnp.mean(x, axis=-1, keepdims=True)
    var = jnp.mean((x - mean) ** 2, axis=-1, keepdims=True)
    return (x - mean) / jnp.sqrt(var + eps) * w + b


if __name__ == "__main__":
    # Small shapes consistent with the module: normalized_shape = (hidden,)
    batch, seq, hidden = 2, 8, 32
    normalized_shape = (hidden,)
    eps = 1e-5

    key = jax.random.PRNGKey(0)
    kx, kw, kb, klw, klb = jax.random.split(key, 5)

    x = jax.random.normal(kx, (batch, seq, hidden), dtype=jnp.float32)
    # Deterministic synthetic parameters (module __init__ shapes).
    weight = jax.random.normal(kw, normalized_shape, dtype=jnp.float32)
    bias = jax.random.normal(kb, normalized_shape, dtype=jnp.float32)
    # lora params live in weight_dict in the module; init them deterministically.
    lora_weight = 0.1 * jax.random.normal(klw, normalized_shape, dtype=jnp.float32)
    lora_bias = 0.1 * jax.random.normal(klb, normalized_shape, dtype=jnp.float32)

    out = lora_layer_norm(x, weight, bias, lora_weight, lora_bias, eps=eps)
    out = jax.block_until_ready(out)

    ref = _reference_layer_norm(x, weight, bias, lora_weight, lora_bias, eps=eps)
    assert jnp.allclose(out, ref, atol=1e-5, rtol=1e-5), "mismatch vs reference"

    # Also exercise a non-tile-divisible / larger shape to validate padding path.
    x2 = jax.random.normal(kx, (3, 7, hidden), dtype=jnp.float32)
    out2 = jax.block_until_ready(
        lora_layer_norm(x2, weight, bias, lora_weight, lora_bias, eps=eps))
    ref2 = _reference_layer_norm(x2, weight, bias, lora_weight, lora_bias, eps=eps)
    assert jnp.allclose(out2, ref2, atol=1e-5, rtol=1e-5), "mismatch (padded path)"

    print("KERNEL_OK")
</pallas_src>

<mosaic_0001>
module attributes {stable_mosaic.version = 11 : i64} {
  func.func @_lora_layernorm_kernel(%arg0: i32, %arg1: memref<16x32xf32, #tpu.memory_space<vmem>>, %arg2: memref<1x32xf32, #tpu.memory_space<vmem>>, %arg3: memref<1x32xf32, #tpu.memory_space<vmem>>, %arg4: memref<16x32xf32, #tpu.memory_space<vmem>>) attributes {dimension_semantics = [#tpu.dimension_semantics<parallel>], iteration_bounds = array<i64: 1>, scalar_prefetch = 0 : i64, scratch_operands = 0 : i64, tpu.core_type = #tpu.core_type<tc>, window_params = [{transform_indices = @transform_0, window_bounds = array<i64: 16, 32>}, {pipeline_mode = #tpu.pipeline_mode<synchronous>, transform_indices = @transform_1, window_bounds = array<i64: 1, 32>}, {pipeline_mode = #tpu.pipeline_mode<synchronous>, transform_indices = @transform_2, window_bounds = array<i64: 1, 32>}, {transform_indices = @transform_3, window_bounds = array<i64: 16, 32>}]} {
    %c0 = arith.constant 0 : index
    %c0_0 = arith.constant 0 : index
    %0 = vector.load %arg1[%c0, %c0_0] : memref<16x32xf32, #tpu.memory_space<vmem>>, vector<16x32xf32>
    %cst = arith.constant dense<0.000000e+00> : vector<16xf32>
    %1 = vector.multi_reduction <add>, %0, %cst [1] : vector<16x32xf32> to vector<16xf32>
    %2 = vector.shape_cast %1 : vector<16xf32> to vector<16x1xf32>
    %cst_1 = arith.constant 3.200000e+01 : f32
    %3 = vector.broadcast %cst_1 : f32 to vector<16x1xf32>
    %4 = arith.divf %2, %3 : vector<16x1xf32>
    %5 = vector.broadcast %4 : vector<16x1xf32> to vector<16x32xf32>
    %6 = arith.subf %0, %5 : vector<16x32xf32>
    %7 = arith.mulf %6, %6 : vector<16x32xf32>
    %cst_2 = arith.constant dense<0.000000e+00> : vector<16xf32>
    %8 = vector.multi_reduction <add>, %7, %cst_2 [1] : vector<16x32xf32> to vector<16xf32>
    %9 = vector.shape_cast %8 : vector<16xf32> to vector<16x1xf32>
    %cst_3 = arith.constant 3.200000e+01 : f32
    %10 = vector.broadcast %cst_3 : f32 to vector<16x1xf32>
    %11 = arith.divf %9, %10 : vector<16x1xf32>
    %cst_4 = arith.constant 9.99999974E-6 : f32
    %12 = vector.broadcast %cst_4 : f32 to vector<16x1xf32>
    %13 = arith.addf %11, %12 : vector<16x1xf32>
    %14 = math.rsqrt %13 : vector<16x1xf32>
    %c0_5 = arith.constant 0 : index
    %c0_6 = arith.constant 0 : index
    %15 = vector.load %arg2[%c0_5, %c0_6] : memref<1x32xf32, #tpu.memory_space<vmem>>, vector<1x32xf32>
    %c0_7 = arith.constant 0 : index
    %c0_8 = arith.constant 0 : index
    %16 = vector.load %arg3[%c0_7, %c0_8] : memref<1x32xf32, #tpu.memory_space<vmem>>, vector<1x32xf32>
    %17 = vector.broadcast %14 : vector<16x1xf32> to vector<16x32xf32>
    %18 = arith.mulf %6, %17 : vector<16x32xf32>
    %19 = vector.broadcast %15 : vector<1x32xf32> to vector<16x32xf32>
    %20 = arith.mulf %18, %19 : vector<16x32xf32>
    %21 = vector.broadcast %16 : vector<1x32xf32> to vector<16x32xf32>
    %22 = arith.addf %20, %21 : vector<16x32xf32>
    %c0_9 = arith.constant 0 : index
    %c0_10 = arith.constant 0 : index
    %23 = vector.load %arg4[%c0_9, %c0_10] : memref<16x32xf32, #tpu.memory_space<vmem>>, vector<16x32xf32>
    tpu.vector_store %arg4[%c0_9, %c0_10], %22 {strides = array<i32>} : memref<16x32xf32, #tpu.memory_space<vmem>>, vector<16x32xf32>,
    return
  }
  func.func @transform_0(%arg0: i32) -> (i32, i32) {
    %c0_i32 = arith.constant 0 : i32
    %c0_i32_0 = arith.constant 0 : i32
    return %arg0, %c0_i32 : i32, i32
  }
  func.func @transform_1(%arg0: i32) -> (i32, i32) {
    %c0_i32 = arith.constant 0 : i32
    %c0_i32_0 = arith.constant 0 : i32
    %c0_i32_1 = arith.constant 0 : i32
    return %c0_i32, %c0_i32_0 : i32, i32
  }
  func.func @transform_2(%arg0: i32) -> (i32, i32) {
    %c0_i32 = arith.constant 0 : i32
    %c0_i32_0 = arith.constant 0 : i32
    %c0_i32_1 = arith.constant 0 : i32
    return %c0_i32, %c0_i32_0 : i32, i32
  }
  func.func @transform_3(%arg0: i32) -> (i32, i32) {
    %c0_i32 = arith.constant 0 : i32
    %c0_i32_0 = arith.constant 0 : i32
    return %arg0, %c0_i32 : i32, i32
  }
}

</mosaic_0001>

<llo_original>
// kernel: tpu_custom_call.1
$region0: #{tpu_custom_call.1}
  #allocation0 [shape = 'u32[]', space=smem, size = 0x4, offset = 0x4, fixed_abs, tag = 'smem constant byte address 0x4 - core index']
  #allocation1 [shape = 'u32[144,128]{1,0:T(1,128)}', space=vmem, size = 0x12000, scoped, tag = 'internal scratch']
  %s0 = inlined_call_operand.hbm [shape: f32[16,32], index: 0, kind: input, shape index: {}]
  %s1 = inlined_call_operand.vmem [shape: f32[1,32], index: 1, kind: input, shape index: {}]
  %s2 = inlined_call_operand.vmem [shape: f32[1,32], index: 2, kind: input, shape index: {}]
  %s3 = inlined_call_operand.hbm [shape: f32[16,32], index: 3, kind: output, shape index: {}]
  %s4 = sld [smem:[#allocation0]]
  $region26: #{tpu_custom_call.1} parent=0
    _
  %s6 = ssub.s32 1, %s4
  %s7 = scalar_select 0, %s6, %s4
  $region1: #{tpu_custom_call.1} parent=0
    #allocation2 [shape = 'u8[8192]{0}', space=vmem, size = 0x2000, scoped, tag = 'input window, operand 0, single buffered']
    #allocation3 [shape = 's32[1]{0}', space=sflag, size = 0x4, scoped, tag = 'scoped memory for tpu_custom_call.1']
    #allocation4 [shape = 's32[1]{0}', space=sflag, size = 0x4, scoped, tag = 'scoped memory for tpu_custom_call.1']
    #allocation5 [shape = 'u8[8192]{0}', space=vmem, size = 0x2000, scoped, tag = 'output window, operand 0, single buffered']
    %8 = vsyncpa [#allocation3], 0
    %9 = vsyncpa [#allocation4], 0
    // Predicated region
    $region2: #{tpu_custom_call.1} parent=1 // pred_check
      _
    $region3: #{tpu_custom_call.1} parent=1 // pred_check_branch
      %11 = sbr.rel (0) target = $region5
    $region4: #{tpu_custom_call.1} parent=1 // pred_region
      %s13 = ssub.s32 256, 256
      %14 = vsyncadd [#allocation3], %s13
      %s15 = sshll.u32 [#allocation2], 4
      %s16 = int_to_ptr.vmem [resolvable:$true] %s15
      %21 = dma.hbm_to_vmem [thread:$0]  %s0, 256, %s16, [#allocation3], 128, 128, 8
    $region5: #{tpu_custom_call.1} parent=1 // pred_fallthru
      _
    // Predicated region
    $region6: #{tpu_custom_call.1} parent=1 // pred_check
      _
    $region7: #{tpu_custom_call.1} parent=1 // pred_check_branch
      %23 = sbr.rel (0) target = $region9
    $region8: #{tpu_custom_call.1} parent=1 // pred_region
      _
    $region9: #{tpu_custom_call.1} parent=1 // pred_fallthru
      _
    // Predicated region
    $region10: #{tpu_custom_call.1} parent=1 // pred_check
      _
    $region11: #{tpu_custom_call.1} parent=1 // pred_check_branch
      %25 = sbr.rel (0) target = $region13
    $region12: #{tpu_custom_call.1} parent=1 // pred_region
      _
    $region13: #{tpu_custom_call.1} parent=1 // pred_fallthru
      _
    // Predicated region
    $region14: #{tpu_custom_call.1} parent=1 // pred_check
      _
    $region15: #{tpu_custom_call.1} parent=1 // pred_check_branch
      %27 = sbr.rel (0) target = $region17
    $region16: #{tpu_custom_call.1} parent=1 // pred_region
      %28 = dma.done [#allocation3], 256
    $region17: #{tpu_custom_call.1} parent=1 // pred_fallthru
      _
    %v29 = vld [vmem:[#allocation2] sm:$0xff]
    %v30 = vld [vmem:[#allocation2 + $0x8] sm:$0xff]
    %vm31 = vcmask 261120
    %v32 = vsel %vm31, %v29, 0.0
    %33 = vadd.xlane.f32.xlu0 %v32
    %v34 = vpop.xlane.xlu0 %33
    %v35 = vsel %vm31, %v30, 0.0
    %36 = vadd.xlane.f32.xlu0 %v35
    %v37 = vpop.xlane.xlu0 %36
    %v38 = vrcp.pop 32.0
    %v39 = vmul.f32 %v34, %v38
    %v40 = vmul.f32 %v37, %v38
    %v41 = vsub.f32 %v29, %v39
    %v42 = vsub.f32 %v30, %v40
    %v43 = vmul.f32 %v41, %v41
    %v44 = vmul.f32 %v42, %v42
    %v45 = vsel %vm31, %v43, 0.0
    %46 = vadd.xlane.f32.xlu0 %v45
    %v47 = vpop.xlane.xlu0 %46
    %v48 = vsel %vm31, %v44, 0.0
    %49 = vadd.xlane.f32.xlu0 %v48
    %v50 = vpop.xlane.xlu0 %49
    %v51 = vmul.f32 %v47, %v38
    %v52 = vmul.f32 %v50, %v38
    %v53 = vadd.f32 %v51, 1e-05
    %v54 = vadd.f32 %v52, 1e-05
    %v55 = vrsqrt.pop %v53
    %v56 = vrsqrt.pop %v54
    %v57 = vld [vmem:[%s1] sm:$0x1]
    %v58 = vld [vmem:[%s2] sm:$0x1]
    %v59 = vmul.f32 %v41, %v55
    %v60 = vmul.f32 %v42, %v56
    %v62 = vlaneseq
    %v63 = vshrl.u32 %v62, 7
    %v64 = vsub.s32 0, %v63
    %v65 = vrot.slane %v57, %v64
    %v67 = vmul.f32 %v59, %v65
    %v68 = vmul.f32 %v60, %v65
    %v70 = vlaneseq
    %v71 = vshrl.u32 %v70, 7
    %v72 = vsub.s32 0, %v71
    %v73 = vrot.slane %v58, %v72
    %v75 = vadd.f32 %v67, %v73
    %v76 = vadd.f32 %v68, %v73
    %77 = vst.msk [vmem:[#allocation5] sm:$0xff] %vm31, %v75
    %78 = vst.msk [vmem:[#allocation5 + $0x8] sm:$0xff] %vm31, %v76
    // Predicated region
    $region18: #{tpu_custom_call.1} parent=1 // pred_check
      _
    $region19: #{tpu_custom_call.1} parent=1 // pred_check_branch
      %80 = sbr.rel (0) target = $region21
    $region20: #{tpu_custom_call.1} parent=1 // pred_region
      %s82 = ssub.s32 256, 256
      %83 = vsyncadd [#allocation4], %s82
      %s84 = sshll.u32 [#allocation5], 4
      %s85 = int_to_ptr.vmem [resolvable:$true] %s84
      %90 = dma.vmem_to_hbm [thread:$0]  %s85, 256, %s3, [#allocation4], 128, 128, 8
    $region21: #{tpu_custom_call.1} parent=1 // pred_fallthru
      _
    // Predicated region
    $region22: #{tpu_custom_call.1} parent=1 // pred_check
      _
    $region23: #{tpu_custom_call.1} parent=1 // pred_check_branch
      %92 = sbr.rel (0) target = $region25
    $region24: #{tpu_custom_call.1} parent=1 // pred_region
      %93 = dma.done [#allocation4], 256
    $region25: #{tpu_custom_call.1} parent=1 // pred_fallthru
      _
    %94 = vsyncpa [#allocation3], 1
    %95 = vsyncpa [#allocation4], 1

</llo_original>
